<compile_context>
chip_gen: v7x
topology: tpu7x:2x2x1
jax: 0.10.0
libtpu: 0.0.40
codegen_flags: <defaults>
</compile_context>

<pallas_src>
import jax
import jax.numpy as jnp
from jax.experimental import pallas as pl
from jax.experimental.pallas import tpu as pltpu

N_WAY = 5          # matches `n_way = 5` in the reference script
EMB_DIM = 64       # backbone embedding dimension (Linear(feat, EMB_DIM))
OUT_LANES = 128    # class/lane width of prototypes & scores (lane-dense store)


def proto_kernel(labels_ref, sup_ref, qry_ref, w_ref, out_ref):
    """Fused backbone + class-mean prototypes + negated Euclidean cdist.

    labels_ref: [1, ns]      int32  support class ids (< N_WAY)
    sup_ref:    [ns, feat]   bf16   flattened support images
    qry_ref:    [nq, feat]   bf16   flattened query images
    w_ref:      [feat, EMB]  bf16   backbone weight (bias cancels -> dropped)
    out_ref:    [nq, 128]    f32    scores; real classes live in lanes [0, N_WAY)
    """
    w = w_ref[...]

    # backbone embeddings: bf16 operands, f32 accumulation; w stays resident
    z_sup = jnp.dot(sup_ref[...], w, preferred_element_type=jnp.float32)   # [ns, EMB]
    z_q = jnp.dot(qry_ref[...], w, preferred_element_type=jnp.float32)     # [nq, EMB]

    # class-mean weights built directly on the 128-row (lane-dense) class grid
    labels = labels_ref[...]                                               # [1, ns]
    cls = jax.lax.broadcasted_iota(jnp.int32, (OUT_LANES, labels.shape[1]), 0)
    oh = (cls == labels).astype(jnp.float32)                               # [128, ns]
    counts = jnp.sum(oh, axis=1, keepdims=True)                            # [128, 1]
    oh = oh / jnp.maximum(counts, 1.0)

    # prototypes; rows >= n_way are exactly zero and never read back
    z_p = jnp.dot(oh, z_sup, preferred_element_type=jnp.float32)           # [128, EMB]

    # ||q||^2 + ||p||^2 - 2 q.p  -- both prototype terms go through the MXU so
    # the class index lands on the lane axis (no XLU relayout), and the final
    # store is a full-width unmasked vst (no concat / zero pad).
    qp = jax.lax.dot_general(z_q, z_p, (((1,), (1,)), ((), ())),
                             preferred_element_type=jnp.float32)           # [nq, 128]
    ones_row = jnp.ones((1, z_p.shape[1]), jnp.float32)
    p_sq = jax.lax.dot_general(ones_row, z_p * z_p, (((1,), (1,)), ((), ())),
                               preferred_element_type=jnp.float32)         # [1, 128]
    q_sq = jnp.sum(z_q * z_q, axis=-1, keepdims=True)                      # [nq, 1]

    d2 = jnp.maximum(q_sq + p_sq - 2.0 * qp, 0.0)
    out_ref[...] = -jnp.sqrt(d2)


def prepare_backbone_params(w, b):
    """One-time parameter prep (hoisted out of the per-episode path).

    The Linear bias cancels exactly in (q@w + b) - mean(s@w + b), so only the
    weight -- cast once to its kernel-ready bf16 form -- is kept.
    """
    del b
    return jnp.asarray(w, jnp.bfloat16)


def prototypical_forward(support_images, support_labels, query_images, w_bf16):
    """Per-episode forward: flatten + cast only; all episode math is in-kernel."""
    ns = support_images.shape[0]
    nq = query_images.shape[0]
    feat = support_images.shape[1] * support_images.shape[2] * support_images.shape[3]

    # flatten (contiguous NCHW -> layout no-op) + a single cast each; a
    # bf16-native producer makes the casts free as well.
    sup = support_images.reshape(ns, feat).astype(jnp.bfloat16)
    qry = query_images.reshape(nq, feat).astype(jnp.bfloat16)
    labels = support_labels.reshape(1, ns).astype(jnp.int32)

    # TODO(synk): torch derives n_way from len(torch.unique(support_labels)) at
    # runtime; here the returned class count is the static N_WAY = 5 (the
    # kernel itself scores any label id < 128 correctly).
    scores_full = pl.pallas_call(
        proto_kernel,
        out_shape=jax.ShapeDtypeStruct((nq, OUT_LANES), jnp.float32),
        in_specs=[pl.BlockSpec(memory_space=pltpu.MemorySpace.VMEM)] * 4,
        out_specs=pl.BlockSpec(memory_space=pltpu.MemorySpace.VMEM),
        # gridless single shot: whole episode fits in VMEM on v5e/v6e/v7x.
    )(labels, sup, qry, w_bf16)

    return scores_full[:, :N_WAY]


def reference_forward(support_images, support_labels, query_images, w, b):
    """Pure-JAX f32 reference mirroring the PyTorch semantics (bias included)."""
    ns = support_images.shape[0]
    nq = query_images.shape[0]
    feat = support_images.shape[1] * support_images.shape[2] * support_images.shape[3]
    z_sup = support_images.reshape(ns, feat).astype(jnp.float32) @ w + b
    z_qry = query_images.reshape(nq, feat).astype(jnp.float32) @ w + b
    protos = []
    for label in range(N_WAY):
        mask = (support_labels == label).astype(jnp.float32)[:, None]
        protos.append(jnp.sum(z_sup * mask, axis=0) / jnp.maximum(jnp.sum(mask), 1.0))
    z_proto = jnp.stack(protos, axis=0)
    diff = z_qry[:, None, :] - z_proto[None, :, :]
    return -jnp.sqrt(jnp.sum(diff * diff, axis=-1))


if __name__ == "__main__":
    key = jax.random.PRNGKey(0)
    k_img_s, k_img_q, k_w = jax.random.split(key, 3)

    # small episode: 5-way, 2-shot support, 3 queries per class, 4x16x16 images
    C, H, W = 4, 16, 16
    k_shot, q_per_class = 2, 3
    ns, nq = N_WAY * k_shot, N_WAY * q_per_class
    feat = C * H * W

    support_images = jax.random.normal(k_img_s, (ns, C, H, W), dtype=jnp.float32)
    query_images = jax.random.normal(k_img_q, (nq, C, H, W), dtype=jnp.float32)
    support_labels = jnp.repeat(jnp.arange(N_WAY, dtype=jnp.int32), k_shot)

    # deterministic backbone parameters (Flatten -> Linear(feat, EMB_DIM))
    w = (jax.random.normal(k_w, (feat, EMB_DIM), dtype=jnp.float32)
         * (1.0 / jnp.sqrt(jnp.float32(feat))))
    b = jnp.zeros((EMB_DIM,), dtype=jnp.float32)

    # one-time parameter prep (NOT part of the per-episode path)
    w_bf16 = prepare_backbone_params(w, b)

    fwd = jax.jit(prototypical_forward)
    scores = fwd(support_images, support_labels, query_images, w_bf16)
    jax.block_until_ready(scores)

    ref = reference_forward(support_images, support_labels, query_images, w, b)
    assert scores.shape == (nq, N_WAY)
    # tolerance accounts for the bf16 cast of the matmul operands (f32 accum);
    # observed error is ~1e-3 relative on distances ~10.
    assert jnp.allclose(scores, ref, atol=2e-2, rtol=1e-2), "mismatch vs reference"

    print("KERNEL_OK")
</pallas_src>

<mosaic_0001>
module attributes {stable_mosaic.version = 11 : i64} {
  func.func @proto_kernel(%arg0: memref<1x10xi32, #tpu.memory_space<vmem>>, %arg1: memref<10x1024xbf16, #tpu.memory_space<vmem>>, %arg2: memref<15x1024xbf16, #tpu.memory_space<vmem>>, %arg3: memref<1024x64xbf16, #tpu.memory_space<vmem>>, %arg4: memref<15x128xf32, #tpu.memory_space<vmem>>) attributes {dimension_semantics = [], scalar_prefetch = 0 : i64, scratch_operands = 0 : i64, tpu.core_type = #tpu.core_type<tc>} {
    %c0 = arith.constant 0 : index
    %c0_0 = arith.constant 0 : index
    %0 = vector.load %arg3[%c0, %c0_0] : memref<1024x64xbf16, #tpu.memory_space<vmem>>, vector<1024x64xbf16>
    %c0_1 = arith.constant 0 : index
    %c0_2 = arith.constant 0 : index
    %1 = vector.load %arg1[%c0_1, %c0_2] : memref<10x1024xbf16, #tpu.memory_space<vmem>>, vector<10x1024xbf16>
    %cst = arith.constant dense<0.000000e+00> : vector<10x64xf32>
    %2 = tpu.matmul %1, %0, %cst {dimension_numbers = #tpu.dot_dimension_numbers<[1], [0], [0], [1], [0, 0, 1, 1], [], []>} : vector<10x1024xbf16>, vector<1024x64xbf16>, vector<10x64xf32> -> vector<10x64xf32>
    %c0_3 = arith.constant 0 : index
    %c0_4 = arith.constant 0 : index
    %3 = vector.load %arg2[%c0_3, %c0_4] : memref<15x1024xbf16, #tpu.memory_space<vmem>>, vector<15x1024xbf16>
    %cst_5 = arith.constant dense<0.000000e+00> : vector<15x64xf32>
    %4 = tpu.matmul %3, %0, %cst_5 {dimension_numbers = #tpu.dot_dimension_numbers<[1], [0], [0], [1], [0, 0, 1, 1], [], []>} : vector<15x1024xbf16>, vector<1024x64xbf16>, vector<15x64xf32> -> vector<15x64xf32>
    %c0_6 = arith.constant 0 : index
    %c0_7 = arith.constant 0 : index
    %5 = vector.load %arg0[%c0_6, %c0_7] : memref<1x10xi32, #tpu.memory_space<vmem>>, vector<1x10xi32>
    %6 = tpu.iota {dimensions = array<i32: 0>} : vector<128x10xi32>
    %7 = vector.broadcast %5 : vector<1x10xi32> to vector<128x10xi32>
    %8 = arith.cmpi eq, %6, %7 : vector<128x10xi32>
    %9 = arith.extui %8 : vector<128x10xi1> to vector<128x10xi32>
    %10 = arith.sitofp %9 : vector<128x10xi32> to vector<128x10xf32>
    %cst_8 = arith.constant dense<0.000000e+00> : vector<128xf32>
    %11 = vector.multi_reduction <add>, %10, %cst_8 [1] : vector<128x10xf32> to vector<128xf32>
    %12 = vector.shape_cast %11 : vector<128xf32> to vector<128x1xf32>
    %cst_9 = arith.constant 1.000000e+00 : f32
    %13 = vector.broadcast %cst_9 : f32 to vector<128x1xf32>
    %14 = arith.maximumf %12, %13 : vector<128x1xf32>
    %15 = vector.broadcast %14 : vector<128x1xf32> to vector<128x10xf32>
    %16 = arith.divf %10, %15 : vector<128x10xf32>
    %cst_10 = arith.constant dense<0.000000e+00> : vector<128x64xf32>
    %17 = tpu.matmul %16, %2, %cst_10 {dimension_numbers = #tpu.dot_dimension_numbers<[1], [0], [0], [1], [0, 0, 1, 1], [], []>} : vector<128x10xf32>, vector<10x64xf32>, vector<128x64xf32> -> vector<128x64xf32>
    %cst_11 = arith.constant dense<0.000000e+00> : vector<15x128xf32>
    %18 = tpu.matmul %4, %17, %cst_11 {dimension_numbers = #tpu.dot_dimension_numbers<[1], [1], [0], [0], [0, 0, 1, 0], [], []>} : vector<15x64xf32>, vector<128x64xf32>, vector<15x128xf32> -> vector<15x128xf32>
    %cst_12 = arith.constant 1.000000e+00 : f32
    %19 = vector.broadcast %cst_12 : f32 to vector<1x64xf32>
    %20 = arith.mulf %17, %17 : vector<128x64xf32>
    %cst_13 = arith.constant dense<0.000000e+00> : vector<1x128xf32>
    %21 = tpu.matmul %19, %20, %cst_13 {dimension_numbers = #tpu.dot_dimension_numbers<[1], [1], [0], [0], [0, 0, 1, 0], [], []>} : vector<1x64xf32>, vector<128x64xf32>, vector<1x128xf32> -> vector<1x128xf32>
    %22 = arith.mulf %4, %4 : vector<15x64xf32>
    %cst_14 = arith.constant dense<0.000000e+00> : vector<15xf32>
    %23 = vector.multi_reduction <add>, %22, %cst_14 [1] : vector<15x64xf32> to vector<15xf32>
    %24 = vector.shape_cast %23 : vector<15xf32> to vector<15x1xf32>
    %25 = vector.broadcast %24 : vector<15x1xf32> to vector<15x128xf32>
    %26 = vector.broadcast %21 : vector<1x128xf32> to vector<15x128xf32>
    %27 = arith.addf %25, %26 : vector<15x128xf32>
    %cst_15 = arith.constant 2.000000e+00 : f32
    %28 = vector.broadcast %cst_15 : f32 to vector<15x128xf32>
    %29 = arith.mulf %28, %18 : vector<15x128xf32>
    %30 = arith.subf %27, %29 : vector<15x128xf32>
    %cst_16 = arith.constant 0.000000e+00 : f32
    %31 = vector.broadcast %cst_16 : f32 to vector<15x128xf32>
    %32 = arith.maximumf %30, %31 : vector<15x128xf32>
    %33 = math.sqrt %32 : vector<15x128xf32>
    %cst_17 = arith.constant 0.000000e+00 : f32
    %34 = vector.broadcast %cst_17 : f32 to vector<15x128xf32>
    %35 = arith.subf %34, %33 : vector<15x128xf32>
    %c0_18 = arith.constant 0 : index
    %c0_19 = arith.constant 0 : index
    %36 = vector.load %arg4[%c0_18, %c0_19] : memref<15x128xf32, #tpu.memory_space<vmem>>, vector<15x128xf32>
    tpu.vector_store %arg4[%c0_18, %c0_19], %35 {strides = array<i32>} : memref<15x128xf32, #tpu.memory_space<vmem>>, vector<15x128xf32>,
    return
  }
}

</mosaic_0001>

<llo_original>
// kernel: prototypical_forward.1
$region0: #{prototypical_forward.1}
  #allocation0 [shape = 'u32[]', space=smem, size = 0x4, offset = 0x4, fixed_abs, tag = 'smem constant byte address 0x4 - core index']
  #allocation1 [shape = 'u32[144,128]{1,0:T(1,128)}', space=vmem, size = 0x12000, scoped, tag = 'internal scratch']
  %s0 = inlined_call_operand.vmem [shape: s32[1,10], index: 0, kind: input, shape index: {}]
  %s1 = inlined_call_operand.vmem [shape: bf16[10,1024], index: 1, kind: input, shape index: {}]
  %s2 = inlined_call_operand.vmem [shape: bf16[15,1024], index: 2, kind: input, shape index: {}]
  %s3 = inlined_call_operand.vmem [shape: bf16[1024,64], index: 3, kind: input, shape index: {}]
  %s4 = inlined_call_operand.vmem [shape: f32[15,128], index: 4, kind: output, shape index: {}]
  %s5 = sld [smem:[#allocation0]]
  $region26: #{prototypical_forward.1} parent=0
    _
  %s7 = ssub.s32 1, %s5
  %s8 = scalar_select 0, %s7, %s5
  // Predicated region
  $region2: #{prototypical_forward.1} parent=0 // pred_check
    _
  $region3: #{prototypical_forward.1} parent=0 // pred_check_branch
    %10 = sbr.rel (0) target = $region5
  $region4: #{prototypical_forward.1} parent=0 // pred_region
    _
  $region5: #{prototypical_forward.1} parent=0 // pred_fallthru
    _
  // Predicated region
  $region6: #{prototypical_forward.1} parent=0 // pred_check
    _
  $region7: #{prototypical_forward.1} parent=0 // pred_check_branch
    %12 = sbr.rel (0) target = $region9
  $region8: #{prototypical_forward.1} parent=0 // pred_region
    _
  $region9: #{prototypical_forward.1} parent=0 // pred_fallthru
    _
  // Predicated region
  $region10: #{prototypical_forward.1} parent=0 // pred_check
    _
  $region11: #{prototypical_forward.1} parent=0 // pred_check_branch
    %14 = sbr.rel (0) target = $region13
  $region12: #{prototypical_forward.1} parent=0 // pred_region
    _
  $region13: #{prototypical_forward.1} parent=0 // pred_fallthru
    _
  // Predicated region
  $region14: #{prototypical_forward.1} parent=0 // pred_check
    _
  $region15: #{prototypical_forward.1} parent=0 // pred_check_branch
    %16 = sbr.rel (0) target = $region17
  $region16: #{prototypical_forward.1} parent=0 // pred_region
    _
  $region17: #{prototypical_forward.1} parent=0 // pred_fallthru
    _
  %v18 = vld [vmem:[%s3] sm:$0xf]
  %v19 = vld [vmem:[%s3 + $0x4] sm:$0xf]
  %v20 = vld [vmem:[%s3 + $0x8] sm:$0xf]
  %v21 = vld [vmem:[%s3 + $0xc] sm:$0xf]
  %v22 = vld [vmem:[%s3 + $0x10] sm:$0xf]
  %v23 = vld [vmem:[%s3 + $0x14] sm:$0xf]
  %v24 = vld [vmem:[%s3 + $0x18] sm:$0xf]
  %v25 = vld [vmem:[%s3 + $0x1c] sm:$0xf]
  %v26 = vld [vmem:[%s3 + $0x20] sm:$0xf]
  %v27 = vld [vmem:[%s3 + $0x24] sm:$0xf]
  %v28 = vld [vmem:[%s3 + $0x28] sm:$0xf]
  %v29 = vld [vmem:[%s3 + $0x2c] sm:$0xf]
  %v30 = vld [vmem:[%s3 + $0x30] sm:$0xf]
  %v31 = vld [vmem:[%s3 + $0x34] sm:$0xf]
  %v32 = vld [vmem:[%s3 + $0x38] sm:$0xf]
  %v33 = vld [vmem:[%s3 + $0x3c] sm:$0xf]
  %v34 = vld [vmem:[%s3 + $0x40] sm:$0xf]
  %v35 = vld [vmem:[%s3 + $0x44] sm:$0xf]
  %v36 = vld [vmem:[%s3 + $0x48] sm:$0xf]
  %v37 = vld [vmem:[%s3 + $0x4c] sm:$0xf]
  %v38 = vld [vmem:[%s3 + $0x50] sm:$0xf]
  %v39 = vld [vmem:[%s3 + $0x54] sm:$0xf]
  %v40 = vld [vmem:[%s3 + $0x58] sm:$0xf]
  %v41 = vld [vmem:[%s3 + $0x5c] sm:$0xf]
  %v42 = vld [vmem:[%s3 + $0x60] sm:$0xf]
  %v43 = vld [vmem:[%s3 + $0x64] sm:$0xf]
  %v44 = vld [vmem:[%s3 + $0x68] sm:$0xf]
  %v45 = vld [vmem:[%s3 + $0x6c] sm:$0xf]
  %v46 = vld [vmem:[%s3 + $0x70] sm:$0xf]
  %v47 = vld [vmem:[%s3 + $0x74] sm:$0xf]
  %v48 = vld [vmem:[%s3 + $0x78] sm:$0xf]
  %v49 = vld [vmem:[%s3 + $0x7c] sm:$0xf]
  %v50 = vld [vmem:[%s3 + $0x80] sm:$0xf]
  %v51 = vld [vmem:[%s3 + $0x84] sm:$0xf]
  %v52 = vld [vmem:[%s3 + $0x88] sm:$0xf]
  %v53 = vld [vmem:[%s3 + $0x8c] sm:$0xf]
  %v54 = vld [vmem:[%s3 + $0x90] sm:$0xf]
  %v55 = vld [vmem:[%s3 + $0x94] sm:$0xf]
  %v56 = vld [vmem:[%s3 + $0x98] sm:$0xf]
  %v57 = vld [vmem:[%s3 + $0x9c] sm:$0xf]
  %v58 = vld [vmem:[%s3 + $0xa0] sm:$0xf]
  %v59 = vld [vmem:[%s3 + $0xa4] sm:$0xf]
  %v60 = vld [vmem:[%s3 + $0xa8] sm:$0xf]
  %v61 = vld [vmem:[%s3 + $0xac] sm:$0xf]
  %v62 = vld [vmem:[%s3 + $0xb0] sm:$0xf]
  %v63 = vld [vmem:[%s3 + $0xb4] sm:$0xf]
  %v64 = vld [vmem:[%s3 + $0xb8] sm:$0xf]
  %v65 = vld [vmem:[%s3 + $0xbc] sm:$0xf]
  %v66 = vld [vmem:[%s3 + $0xc0] sm:$0xf]
  %v67 = vld [vmem:[%s3 + $0xc4] sm:$0xf]
  %v68 = vld [vmem:[%s3 + $0xc8] sm:$0xf]
  %v69 = vld [vmem:[%s3 + $0xcc] sm:$0xf]
  %v70 = vld [vmem:[%s3 + $0xd0] sm:$0xf]
  %v71 = vld [vmem:[%s3 + $0xd4] sm:$0xf]
  %v72 = vld [vmem:[%s3 + $0xd8] sm:$0xf]
  %v73 = vld [vmem:[%s3 + $0xdc] sm:$0xf]
  %v74 = vld [vmem:[%s3 + $0xe0] sm:$0xf]
  %v75 = vld [vmem:[%s3 + $0xe4] sm:$0xf]
  %v76 = vld [vmem:[%s3 + $0xe8] sm:$0xf]
  %v77 = vld [vmem:[%s3 + $0xec] sm:$0xf]
  %v78 = vld [vmem:[%s3 + $0xf0] sm:$0xf]
  %v79 = vld [vmem:[%s3 + $0xf4] sm:$0xf]
  %v80 = vld [vmem:[%s3 + $0xf8] sm:$0xf]
  %v81 = vld [vmem:[%s3 + $0xfc] sm:$0xf]
  %v82 = vld [vmem:[%s3 + $0x100] sm:$0xf]
  %v83 = vld [vmem:[%s3 + $0x104] sm:$0xf]
  %v84 = vld [vmem:[%s3 + $0x108] sm:$0xf]
  %v85 = vld [vmem:[%s3 + $0x10c] sm:$0xf]
  %v86 = vld [vmem:[%s3 + $0x110] sm:$0xf]
  %v87 = vld [vmem:[%s3 + $0x114] sm:$0xf]
  %v88 = vld [vmem:[%s3 + $0x118] sm:$0xf]
  %v89 = vld [vmem:[%s3 + $0x11c] sm:$0xf]
  %v90 = vld [vmem:[%s3 + $0x120] sm:$0xf]
  %v91 = vld [vmem:[%s3 + $0x124] sm:$0xf]
  %v92 = vld [vmem:[%s3 + $0x128] sm:$0xf]
  %v93 = vld [vmem:[%s3 + $0x12c] sm:$0xf]
  %v94 = vld [vmem:[%s3 + $0x130] sm:$0xf]
  %v95 = vld [vmem:[%s3 + $0x134] sm:$0xf]
  %v96 = vld [vmem:[%s3 + $0x138] sm:$0xf]
  %v97 = vld [vmem:[%s3 + $0x13c] sm:$0xf]
  %v98 = vld [vmem:[%s3 + $0x140] sm:$0xf]
  %v99 = vld [vmem:[%s3 + $0x144] sm:$0xf]
  %v100 = vld [vmem:[%s3 + $0x148] sm:$0xf]
  %v101 = vld [vmem:[%s3 + $0x14c] sm:$0xf]
  %v102 = vld [vmem:[%s3 + $0x150] sm:$0xf]
  %v103 = vld [vmem:[%s3 + $0x154] sm:$0xf]
  %v104 = vld [vmem:[%s3 + $0x158] sm:$0xf]
  %v105 = vld [vmem:[%s3 + $0x15c] sm:$0xf]
  %v106 = vld [vmem:[%s3 + $0x160] sm:$0xf]
  %v107 = vld [vmem:[%s3 + $0x164] sm:$0xf]
  %v108 = vld [vmem:[%s3 + $0x168] sm:$0xf]
  %v109 = vld [vmem:[%s3 + $0x16c] sm:$0xf]
  %v110 = vld [vmem:[%s3 + $0x170] sm:$0xf]
  %v111 = vld [vmem:[%s3 + $0x174] sm:$0xf]
  %v112 = vld [vmem:[%s3 + $0x178] sm:$0xf]
  %v113 = vld [vmem:[%s3 + $0x17c] sm:$0xf]
  %v114 = vld [vmem:[%s3 + $0x180] sm:$0xf]
  %v115 = vld [vmem:[%s3 + $0x184] sm:$0xf]
  %v116 = vld [vmem:[%s3 + $0x188] sm:$0xf]
  %v117 = vld [vmem:[%s3 + $0x18c] sm:$0xf]
  %v118 = vld [vmem:[%s3 + $0x190] sm:$0xf]
  %v119 = vld [vmem:[%s3 + $0x194] sm:$0xf]
  %v120 = vld [vmem:[%s3 + $0x198] sm:$0xf]
  %v121 = vld [vmem:[%s3 + $0x19c] sm:$0xf]
  %v122 = vld [vmem:[%s3 + $0x1a0] sm:$0xf]
  %v123 = vld [vmem:[%s3 + $0x1a4] sm:$0xf]
  %v124 = vld [vmem:[%s3 + $0x1a8] sm:$0xf]
  %v125 = vld [vmem:[%s3 + $0x1ac] sm:$0xf]
  %v126 = vld [vmem:[%s3 + $0x1b0] sm:$0xf]
  %v127 = vld [vmem:[%s3 + $0x1b4] sm:$0xf]
  %v128 = vld [vmem:[%s3 + $0x1b8] sm:$0xf]
  %v129 = vld [vmem:[%s3 + $0x1bc] sm:$0xf]
  %v130 = vld [vmem:[%s3 + $0x1c0] sm:$0xf]
  %v131 = vld [vmem:[%s3 + $0x1c4] sm:$0xf]
  %v132 = vld [vmem:[%s3 + $0x1c8] sm:$0xf]
  %v133 = vld [vmem:[%s3 + $0x1cc] sm:$0xf]
  %v134 = vld [vmem:[%s3 + $0x1d0] sm:$0xf]
  %v135 = vld [vmem:[%s3 + $0x1d4] sm:$0xf]
  %v136 = vld [vmem:[%s3 + $0x1d8] sm:$0xf]
  %v137 = vld [vmem:[%s3 + $0x1dc] sm:$0xf]
  %v138 = vld [vmem:[%s3 + $0x1e0] sm:$0xf]
  %v139 = vld [vmem:[%s3 + $0x1e4] sm:$0xf]
  %v140 = vld [vmem:[%s3 + $0x1e8] sm:$0xf]
  %v141 = vld [vmem:[%s3 + $0x1ec] sm:$0xf]
  %v142 = vld [vmem:[%s3 + $0x1f0] sm:$0xf]
  %v143 = vld [vmem:[%s3 + $0x1f4] sm:$0xf]
  %v144 = vld [vmem:[%s3 + $0x1f8] sm:$0xf]
  %v145 = vld [vmem:[%s3 + $0x1fc] sm:$0xf]
  %v146 = vld [vmem:[%s1] sm:$0xff]
  %v147 = vld [vmem:[%s1 + $0x8] sm:$0xff]
  %v148 = vld [vmem:[%s1 + $0x10] sm:$0xff]
  %v149 = vld [vmem:[%s1 + $0x18] sm:$0xff]
  %v150 = vld [vmem:[%s1 + $0x20] sm:$0x11]
  %v151 = vld [vmem:[%s1 + $0x28] sm:$0x11]
  %v152 = vld [vmem:[%s1 + $0x30] sm:$0x11]
  %v153 = vld [vmem:[%s1 + $0x38] sm:$0x11]
  %v162 = vunpack.c.l.b16 %v146
  %v163 = vunpack.c.h.b16 %v146
  %v164 = vunpack.c.l.b16 %v147
  %v165 = vunpack.c.h.b16 %v147
  %v166 = vunpack.c.l.b16 %v148
  %v167 = vunpack.c.h.b16 %v148
  %v168 = vunpack.c.l.b16 %v149
  %v169 = vunpack.c.h.b16 %v149
  %v170 = vunpack.c.l.b16 %v150
  %v171 = vunpack.c.h.b16 %v150
  %v172 = vunpack.c.l.b16 %v151
  %v173 = vunpack.c.h.b16 %v151
  %v174 = vunpack.c.l.b16 %v152
  %v175 = vunpack.c.h.b16 %v152
  %v176 = vunpack.c.l.b16 %v153
  %v177 = vunpack.c.h.b16 %v153
  %v178 = vpack.c.b16 %v170, %v162
  %v179 = vpack.c.b16 %v171, %v163
  %v180 = vpack.c.b16 %v172, %v164
  %v181 = vpack.c.b16 %v173, %v165
  %v182 = vpack.c.b16 %v174, %v166
  %v183 = vpack.c.b16 %v175, %v167
  %v184 = vpack.c.b16 %v176, %v168
  %v185 = vpack.c.b16 %v177, %v169
  %v322 = vunpack.c.l.b16 %v18
  %v323 = vunpack.c.l.b16 %v19
  %v324 = vunpack.c.l.b16 %v20
  %v325 = vunpack.c.l.b16 %v21
  %v326 = vunpack.c.l.b16 %v22
  %v327 = vunpack.c.l.b16 %v23
  %v328 = vunpack.c.l.b16 %v24
  %v329 = vunpack.c.l.b16 %v25
  %v330 = vunpack.c.l.b16 %v26
  %v331 = vunpack.c.l.b16 %v27
  %v332 = vunpack.c.l.b16 %v28
  %v333 = vunpack.c.l.b16 %v29
  %v334 = vunpack.c.l.b16 %v30
  %v335 = vunpack.c.l.b16 %v31
  %v336 = vunpack.c.l.b16 %v32
  %v337 = vunpack.c.l.b16 %v33
  %v338 = vunpack.c.l.b16 %v34
  %v339 = vunpack.c.l.b16 %v35
  %v340 = vunpack.c.l.b16 %v36
  %v341 = vunpack.c.l.b16 %v37
  %v342 = vunpack.c.l.b16 %v38
  %v343 = vunpack.c.l.b16 %v39
  %v344 = vunpack.c.l.b16 %v40
  %v345 = vunpack.c.l.b16 %v41
  %v346 = vunpack.c.l.b16 %v42
  %v347 = vunpack.c.l.b16 %v43
  %v348 = vunpack.c.l.b16 %v44
  %v349 = vunpack.c.l.b16 %v45
  %v350 = vunpack.c.l.b16 %v46
  %v351 = vunpack.c.l.b16 %v47
  %v352 = vunpack.c.l.b16 %v48
  %v353 = vunpack.c.l.b16 %v49
  %v354 = vunpack.c.l.b16 %v50
  %v355 = vunpack.c.l.b16 %v51
  %v356 = vunpack.c.l.b16 %v52
  %v357 = vunpack.c.l.b16 %v53
  %v358 = vunpack.c.l.b16 %v54
  %v359 = vunpack.c.l.b16 %v55
  %v360 = vunpack.c.l.b16 %v56
  %v361 = vunpack.c.l.b16 %v57
  %v362 = vunpack.c.l.b16 %v58
  %v363 = vunpack.c.l.b16 %v59
  %v364 = vunpack.c.l.b16 %v60
  %v365 = vunpack.c.l.b16 %v61
  %v366 = vunpack.c.l.b16 %v62
  %v367 = vunpack.c.l.b16 %v63
  %v368 = vunpack.c.l.b16 %v64
  %v369 = vunpack.c.l.b16 %v65
  %v370 = vunpack.c.l.b16 %v66
  %v371 = vunpack.c.l.b16 %v67
  %v372 = vunpack.c.l.b16 %v68
  %v373 = vunpack.c.l.b16 %v69
  %v374 = vunpack.c.l.b16 %v70
  %v375 = vunpack.c.l.b16 %v71
  %v376 = vunpack.c.l.b16 %v72
  %v377 = vunpack.c.l.b16 %v73
  %v378 = vunpack.c.l.b16 %v74
  %v379 = vunpack.c.l.b16 %v75
  %v380 = vunpack.c.l.b16 %v76
  %v381 = vunpack.c.l.b16 %v77
  %v382 = vunpack.c.l.b16 %v78
  %v383 = vunpack.c.l.b16 %v79
  %v384 = vunpack.c.l.b16 %v80
  %v385 = vunpack.c.l.b16 %v81
  %v386 = vunpack.c.l.b16 %v82
  %v387 = vunpack.c.l.b16 %v83
  %v388 = vunpack.c.l.b16 %v84
  %v389 = vunpack.c.l.b16 %v85
  %v390 = vunpack.c.l.b16 %v86
  %v391 = vunpack.c.l.b16 %v87
  %v392 = vunpack.c.l.b16 %v88
  %v393 = vunpack.c.l.b16 %v89
  %v394 = vunpack.c.l.b16 %v90
  %v395 = vunpack.c.l.b16 %v91
  %v396 = vunpack.c.l.b16 %v92
  %v397 = vunpack.c.l.b16 %v93
  %v398 = vunpack.c.l.b16 %v94
  %v399 = vunpack.c.l.b16 %v95
  %v400 = vunpack.c.l.b16 %v96
  %v401 = vunpack.c.l.b16 %v97
  %v402 = vunpack.c.l.b16 %v98
  %v403 = vunpack.c.l.b16 %v99
  %v404 = vunpack.c.l.b16 %v100
  %v405 = vunpack.c.l.b16 %v101
  %v406 = vunpack.c.l.b16 %v102
  %v407 = vunpack.c.l.b16 %v103
  %v408 = vunpack.c.l.b16 %v104
  %v409 = vunpack.c.l.b16 %v105
  %v410 = vunpack.c.l.b16 %v106
  %v411 = vunpack.c.l.b16 %v107
  %v412 = vunpack.c.l.b16 %v108
  %v413 = vunpack.c.l.b16 %v109
  %v414 = vunpack.c.l.b16 %v110
  %v415 = vunpack.c.l.b16 %v111
  %v416 = vunpack.c.l.b16 %v112
  %v417 = vunpack.c.l.b16 %v113
  %v418 = vunpack.c.l.b16 %v114
  %v419 = vunpack.c.l.b16 %v115
  %v420 = vunpack.c.l.b16 %v116
  %v421 = vunpack.c.l.b16 %v117
  %v422 = vunpack.c.l.b16 %v118
  %v423 = vunpack.c.l.b16 %v119
  %v424 = vunpack.c.l.b16 %v120
  %v425 = vunpack.c.l.b16 %v121
  %v426 = vunpack.c.l.b16 %v122
  %v427 = vunpack.c.l.b16 %v123
  %v428 = vunpack.c.l.b16 %v124
  %v429 = vunpack.c.l.b16 %v125
  %v430 = vunpack.c.l.b16 %v126
  %v431 = vunpack.c.l.b16 %v127
  %v432 = vunpack.c.l.b16 %v128
  %v433 = vunpack.c.l.b16 %v129
  %v434 = vunpack.c.l.b16 %v130
  %v435 = vunpack.c.l.b16 %v131
  %v436 = vunpack.c.l.b16 %v132
  %v437 = vunpack.c.l.b16 %v133
  %v438 = vunpack.c.l.b16 %v134
  %v439 = vunpack.c.l.b16 %v135
  %v440 = vunpack.c.l.b16 %v136
  %v441 = vunpack.c.l.b16 %v137
  %v442 = vunpack.c.l.b16 %v138
  %v443 = vunpack.c.l.b16 %v139
  %v444 = vunpack.c.l.b16 %v140
  %v445 = vunpack.c.l.b16 %v141
  %v446 = vunpack.c.l.b16 %v142
  %v447 = vunpack.c.l.b16 %v143
  %v448 = vunpack.c.l.b16 %v144
  %v449 = vunpack.c.l.b16 %v145
  %v450 = vpack.c.b16 %v323, %v322
  %v451 = vpack.c.b16 %v325, %v324
  %v452 = vpack.c.b16 %v327, %v326
  %v453 = vpack.c.b16 %v329, %v328
  %v454 = vpack.c.b16 %v331, %v330
  %v455 = vpack.c.b16 %v333, %v332
  %v456 = vpack.c.b16 %v335, %v334
  %v457 = vpack.c.b16 %v337, %v336
  %v458 = vpack.c.b16 %v339, %v338
  %v459 = vpack.c.b16 %v341, %v340
  %v460 = vpack.c.b16 %v343, %v342
  %v461 = vpack.c.b16 %v345, %v344
  %v462 = vpack.c.b16 %v347, %v346
  %v463 = vpack.c.b16 %v349, %v348
  %v464 = vpack.c.b16 %v351, %v350
  %v465 = vpack.c.b16 %v353, %v352
  %v466 = vpack.c.b16 %v355, %v354
  %v467 = vpack.c.b16 %v357, %v356
  %v468 = vpack.c.b16 %v359, %v358
  %v469 = vpack.c.b16 %v361, %v360
  %v470 = vpack.c.b16 %v363, %v362
  %v471 = vpack.c.b16 %v365, %v364
  %v472 = vpack.c.b16 %v367, %v366
  %v473 = vpack.c.b16 %v369, %v368
  %v474 = vpack.c.b16 %v371, %v370
  %v475 = vpack.c.b16 %v373, %v372
  %v476 = vpack.c.b16 %v375, %v374
  %v477 = vpack.c.b16 %v377, %v376
  %v478 = vpack.c.b16 %v379, %v378
  %v479 = vpack.c.b16 %v381, %v380
  %v480 = vpack.c.b16 %v383, %v382
  %v481 = vpack.c.b16 %v385, %v384
  %v482 = vpack.c.b16 %v387, %v386
  %v483 = vpack.c.b16 %v389, %v388
  %v484 = vpack.c.b16 %v391, %v390
  %v485 = vpack.c.b16 %v393, %v392
  %v486 = vpack.c.b16 %v395, %v394
  %v487 = vpack.c.b16 %v397, %v396
  %v488 = vpack.c.b16 %v399, %v398
  %v489 = vpack.c.b16 %v401, %v400
  %v490 = vpack.c.b16 %v403, %v402
  %v491 = vpack.c.b16 %v405, %v404
  %v492 = vpack.c.b16 %v407, %v406
  %v493 = vpack.c.b16 %v409, %v408
  %v494 = vpack.c.b16 %v411, %v410
  %v495 = vpack.c.b16 %v413, %v412
  %v496 = vpack.c.b16 %v415, %v414
  %v497 = vpack.c.b16 %v417, %v416
  %v498 = vpack.c.b16 %v419, %v418
  %v499 = vpack.c.b16 %v421, %v420
  %v500 = vpack.c.b16 %v423, %v422
  %v501 = vpack.c.b16 %v425, %v424
  %v502 = vpack.c.b16 %v427, %v426
  %v503 = vpack.c.b16 %v429, %v428
  %v504 = vpack.c.b16 %v431, %v430
  %v505 = vpack.c.b16 %v433, %v432
  %v506 = vpack.c.b16 %v435, %v434
  %v507 = vpack.c.b16 %v437, %v436
  %v508 = vpack.c.b16 %v439, %v438
  %v509 = vpack.c.b16 %v441, %v440
  %v510 = vpack.c.b16 %v443, %v442
  %v511 = vpack.c.b16 %v445, %v444
  %v512 = vpack.c.b16 %v447, %v446
  %v513 = vpack.c.b16 %v449, %v448
  %578 = vmatprep.subr.bf16.mxu0 0
  %579 = vmatpush1.bf16.msra.mxu0 %v450
  %580 = vmatprep.subr.bf16.mxu0 0
  %581 = vmatpush1.bf16.msra.mxu0 %v451
  %582 = vmatprep.subr.bf16.mxu0 0
  %583 = vmatpush1.bf16.msra.mxu0 %v452
  %584 = vmatprep.subr.bf16.mxu0 0
  %585 = vmatpush1.bf16.msra.mxu0 %v453
  %586 = vmatprep.subr.bf16.mxu0 0
  %587 = vmatpush1.bf16.msra.mxu0 %v454
  %588 = vmatprep.subr.bf16.mxu0 0
  %589 = vmatpush1.bf16.msra.mxu0 %v455
  %590 = vmatprep.subr.bf16.mxu0 0
  %591 = vmatpush1.bf16.msra.mxu0 %v456
  %592 = vmatprep.subr.bf16.mxu0 0
  %593 = vmatpush1.bf16.msra.mxu0 %v457
  %594 = vmatprep.subr.bf16.mxu0 0
  %595 = vmatpush1.bf16.msra.mxu0 %v458
  %596 = vmatprep.subr.bf16.mxu0 0
  %597 = vmatpush1.bf16.msra.mxu0 %v459
  %598 = vmatprep.subr.bf16.mxu0 0
  %599 = vmatpush1.bf16.msra.mxu0 %v460
  %600 = vmatprep.subr.bf16.mxu0 0
  %601 = vmatpush1.bf16.msra.mxu0 %v461
  %602 = vmatprep.subr.bf16.mxu0 0
  %603 = vmatpush1.bf16.msra.mxu0 %v462
  %604 = vmatprep.subr.bf16.mxu0 0
  %605 = vmatpush1.bf16.msra.mxu0 %v463
  %606 = vmatprep.subr.bf16.mxu0 0
  %607 = vmatpush1.bf16.msra.mxu0 %v464
  %608 = vmatprep.subr.bf16.mxu0 0
  %609 = vmatpush1.bf16.msra.mxu0 %v465
  %610 = vmatprep.mubr.bf16.mxu0 %v179
  %611 = vmatmul.mubr.bf16.gmra.mrb[0].mxu0 %v178
  %v612 = vpop.f32.mrb[0].mxu0
  %v613 = vadd.f32 0.0, %v612
  %v614 = vpop.f32.mrb[0].mxu0
  %v615 = vpop.f32.mrb[0].mxu0
  %v616 = vadd.f32 0.0, %v615
  %v617 = vpop.f32.mrb[0].mxu0
  %618 = vdwg.mxu0
  %619 = vmatprep.subr.bf16.mxu0 0
  %620 = vmatpush1.bf16.msra.mxu0 %v466
  %621 = vmatprep.subr.bf16.mxu0 0
  %622 = vmatpush1.bf16.msra.mxu0 %v467
  %623 = vmatprep.subr.bf16.mxu0 0
  %624 = vmatpush1.bf16.msra.mxu0 %v468
  %625 = vmatprep.subr.bf16.mxu0 0
  %626 = vmatpush1.bf16.msra.mxu0 %v469
  %627 = vmatprep.subr.bf16.mxu0 0
  %628 = vmatpush1.bf16.msra.mxu0 %v470
  %629 = vmatprep.subr.bf16.mxu0 0
  %630 = vmatpush1.bf16.msra.mxu0 %v471
  %631 = vmatprep.subr.bf16.mxu0 0
  %632 = vmatpush1.bf16.msra.mxu0 %v472
  %633 = vmatprep.subr.bf16.mxu0 0
  %634 = vmatpush1.bf16.msra.mxu0 %v473
  %635 = vmatprep.subr.bf16.mxu0 0
  %636 = vmatpush1.bf16.msra.mxu0 %v474
  %637 = vmatprep.subr.bf16.mxu0 0
  %638 = vmatpush1.bf16.msra.mxu0 %v475
  %639 = vmatprep.subr.bf16.mxu0 0
  %640 = vmatpush1.bf16.msra.mxu0 %v476
  %641 = vmatprep.subr.bf16.mxu0 0
  %642 = vmatpush1.bf16.msra.mxu0 %v477
  %643 = vmatprep.subr.bf16.mxu0 0
  %644 = vmatpush1.bf16.msra.mxu0 %v478
  %645 = vmatprep.subr.bf16.mxu0 0
  %646 = vmatpush1.bf16.msra.mxu0 %v479
  %647 = vmatprep.subr.bf16.mxu0 0
  %648 = vmatpush1.bf16.msra.mxu0 %v480
  %649 = vmatprep.subr.bf16.mxu0 0
  %650 = vmatpush1.bf16.msra.mxu0 %v481
  %651 = vmatprep.mubr.bf16.mxu0 %v181
  %652 = vmatmul.mubr.bf16.gmra.mrb[0].mxu0 %v180
  %v653 = vpop.f32.mrb[0].mxu0
  %v654 = vadd.f32 %v613, %v653
  %v655 = vpop.f32.mrb[0].mxu0
  %v656 = vpop.f32.mrb[0].mxu0
  %v657 = vadd.f32 %v616, %v656
  %v658 = vpop.f32.mrb[0].mxu0
  %659 = vdwg.mxu0
  %660 = vmatprep.subr.bf16.mxu0 0
  %661 = vmatpush1.bf16.msra.mxu0 %v482
  %662 = vmatprep.subr.bf16.mxu0 0
  %663 = vmatpush1.bf16.msra.mxu0 %v483
  %664 = vmatprep.subr.bf16.mxu0 0
  %665 = vmatpush1.bf16.msra.mxu0 %v484
  %666 = vmatprep.subr.bf16.mxu0 0
  %667 = vmatpush1.bf16.msra.mxu0 %v485
  %668 = vmatprep.subr.bf16.mxu0 0
  %669 = vmatpush1.bf16.msra.mxu0 %v486
  %670 = vmatprep.subr.bf16.mxu0 0
  %671 = vmatpush1.bf16.msra.mxu0 %v487
  %672 = vmatprep.subr.bf16.mxu0 0
  %673 = vmatpush1.bf16.msra.mxu0 %v488
  %674 = vmatprep.subr.bf16.mxu0 0
  %675 = vmatpush1.bf16.msra.mxu0 %v489
  %676 = vmatprep.subr.bf16.mxu0 0
  %677 = vmatpush1.bf16.msra.mxu0 %v490
  %678 = vmatprep.subr.bf16.mxu0 0
  %679 = vmatpush1.bf16.msra.mxu0 %v491
  %680 = vmatprep.subr.bf16.mxu0 0
  %681 = vmatpush1.bf16.msra.mxu0 %v492
  %682 = vmatprep.subr.bf16.mxu0 0
  %683 = vmatpush1.bf16.msra.mxu0 %v493
  %684 = vmatprep.subr.bf16.mxu0 0
  %685 = vmatpush1.bf16.msra.mxu0 %v494
  %686 = vmatprep.subr.bf16.mxu0 0
  %687 = vmatpush1.bf16.msra.mxu0 %v495
  %688 = vmatprep.subr.bf16.mxu0 0
  %689 = vmatpush1.bf16.msra.mxu0 %v496
  %690 = vmatprep.subr.bf16.mxu0 0
  %691 = vmatpush1.bf16.msra.mxu0 %v497
  %692 = vmatprep.mubr.bf16.mxu0 %v183
  %693 = vmatmul.mubr.bf16.gmra.mrb[0].mxu0 %v182
  %v694 = vpop.f32.mrb[0].mxu0
  %v695 = vadd.f32 %v654, %v694
  %v696 = vpop.f32.mrb[0].mxu0
  %v697 = vpop.f32.mrb[0].mxu0
  %v698 = vadd.f32 %v657, %v697
  %v699 = vpop.f32.mrb[0].mxu0
  %700 = vdwg.mxu0
  %701 = vmatprep.subr.bf16.mxu0 0
  %702 = vmatpush1.bf16.msra.mxu0 %v498
  %703 = vmatprep.subr.bf16.mxu0 0
  %704 = vmatpush1.bf16.msra.mxu0 %v499
  %705 = vmatprep.subr.bf16.mxu0 0
  %706 = vmatpush1.bf16.msra.mxu0 %v500
  %707 = vmatprep.subr.bf16.mxu0 0
  %708 = vmatpush1.bf16.msra.mxu0 %v501
  %709 = vmatprep.subr.bf16.mxu0 0
  %710 = vmatpush1.bf16.msra.mxu0 %v502
  %711 = vmatprep.subr.bf16.mxu0 0
  %712 = vmatpush1.bf16.msra.mxu0 %v503
  %713 = vmatprep.subr.bf16.mxu0 0
  %714 = vmatpush1.bf16.msra.mxu0 %v504
  %715 = vmatprep.subr.bf16.mxu0 0
  %716 = vmatpush1.bf16.msra.mxu0 %v505
  %717 = vmatprep.subr.bf16.mxu0 0
  %718 = vmatpush1.bf16.msra.mxu0 %v506
  %719 = vmatprep.subr.bf16.mxu0 0
  %720 = vmatpush1.bf16.msra.mxu0 %v507
  %721 = vmatprep.subr.bf16.mxu0 0
  %722 = vmatpush1.bf16.msra.mxu0 %v508
  %723 = vmatprep.subr.bf16.mxu0 0
  %724 = vmatpush1.bf16.msra.mxu0 %v509
  %725 = vmatprep.subr.bf16.mxu0 0
  %726 = vmatpush1.bf16.msra.mxu0 %v510
  %727 = vmatprep.subr.bf16.mxu0 0
  %728 = vmatpush1.bf16.msra.mxu0 %v511
  %729 = vmatprep.subr.bf16.mxu0 0
  %730 = vmatpush1.bf16.msra.mxu0 %v512
  %731 = vmatprep.subr.bf16.mxu0 0
  %732 = vmatpush1.bf16.msra.mxu0 %v513
  %733 = vmatprep.mubr.bf16.mxu0 %v185
  %734 = vmatmul.mubr.bf16.gmra.mrb[0].mxu0 %v184
  %v735 = vpop.f32.mrb[0].mxu0
  %v736 = vadd.f32 %v695, %v735
  %v737 = vpop.f32.mrb[0].mxu0
  %v738 = vpop.f32.mrb[0].mxu0
  %v739 = vadd.f32 %v698, %v738
  %v740 = vpop.f32.mrb[0].mxu0
  %741 = vdwg.mxu0
  %v742 = vld [vmem:[%s2] sm:$0xff]
  %v743 = vld [vmem:[%s2 + $0x8] sm:$0xff]
  %v744 = vld [vmem:[%s2 + $0x10] sm:$0xff]
  %v745 = vld [vmem:[%s2 + $0x18] sm:$0xff]
  %v746 = vld [vmem:[%s2 + $0x20] sm:$0xff]
  %v747 = vld [vmem:[%s2 + $0x28] sm:$0xff]
  %v748 = vld [vmem:[%s2 + $0x30] sm:$0xff]
  %v749 = vld [vmem:[%s2 + $0x38] sm:$0xff]
  %v758 = vunpack.c.l.b16 %v742
  %v759 = vunpack.c.h.b16 %v742
  %v760 = vunpack.c.l.b16 %v743
  %v761 = vunpack.c.h.b16 %v743
  %v762 = vunpack.c.l.b16 %v744
  %v763 = vunpack.c.h.b16 %v744
  %v764 = vunpack.c.l.b16 %v745
  %v765 = vunpack.c.h.b16 %v745
  %v766 = vunpack.c.l.b16 %v746
  %v767 = vunpack.c.h.b16 %v746
  %v768 = vunpack.c.l.b16 %v747
  %v769 = vunpack.c.h.b16 %v747
  %v770 = vunpack.c.l.b16 %v748
  %v771 = vunpack.c.h.b16 %v748
  %v772 = vunpack.c.l.b16 %v749
  %v773 = vunpack.c.h.b16 %v749
  %v774 = vpack.c.b16 %v766, %v758
  %v775 = vpack.c.b16 %v767, %v759
  %v776 = vpack.c.b16 %v768, %v760
  %v777 = vpack.c.b16 %v769, %v761
  %v778 = vpack.c.b16 %v770, %v762
  %v779 = vpack.c.b16 %v771, %v763
  %v780 = vpack.c.b16 %v772, %v764
  %v781 = vpack.c.b16 %v773, %v765
  %790 = vmatprep.subr.bf16.mxu0 0
  %791 = vmatpush1.bf16.msra.mxu0 %v450
  %792 = vmatprep.subr.bf16.mxu0 0
  %793 = vmatpush1.bf16.msra.mxu0 %v451
  %794 = vmatprep.subr.bf16.mxu0 0
  %795 = vmatpush1.bf16.msra.mxu0 %v452
  %796 = vmatprep.subr.bf16.mxu0 0
  %797 = vmatpush1.bf16.msra.mxu0 %v453
  %798 = vmatprep.subr.bf16.mxu0 0
  %799 = vmatpush1.bf16.msra.mxu0 %v454
  %800 = vmatprep.subr.bf16.mxu0 0
  %801 = vmatpush1.bf16.msra.mxu0 %v455
  %802 = vmatprep.subr.bf16.mxu0 0
  %803 = vmatpush1.bf16.msra.mxu0 %v456
  %804 = vmatprep.subr.bf16.mxu0 0
  %805 = vmatpush1.bf16.msra.mxu0 %v457
  %806 = vmatprep.subr.bf16.mxu0 0
  %807 = vmatpush1.bf16.msra.mxu0 %v458
  %808 = vmatprep.subr.bf16.mxu0 0
  %809 = vmatpush1.bf16.msra.mxu0 %v459
  %810 = vmatprep.subr.bf16.mxu0 0
  %811 = vmatpush1.bf16.msra.mxu0 %v460
  %812 = vmatprep.subr.bf16.mxu0 0
  %813 = vmatpush1.bf16.msra.mxu0 %v461
  %814 = vmatprep.subr.bf16.mxu0 0
  %815 = vmatpush1.bf16.msra.mxu0 %v462
  %816 = vmatprep.subr.bf16.mxu0 0
  %817 = vmatpush1.bf16.msra.mxu0 %v463
  %818 = vmatprep.subr.bf16.mxu0 0
  %819 = vmatpush1.bf16.msra.mxu0 %v464
  %820 = vmatprep.subr.bf16.mxu0 0
  %821 = vmatpush1.bf16.msra.mxu0 %v465
  %822 = vmatprep.mubr.bf16.mxu0 %v775
  %823 = vmatmul.mubr.bf16.gmra.mrb[0].mxu0 %v774
  %v824 = vpop.f32.mrb[0].mxu0
  %v825 = vadd.f32 0.0, %v824
  %v826 = vpop.f32.mrb[0].mxu0
  %v827 = vpop.f32.mrb[0].mxu0
  %v828 = vadd.f32 0.0, %v827
  %v829 = vpop.f32.mrb[0].mxu0
  %830 = vdwg.mxu0
  %831 = vmatprep.subr.bf16.mxu0 0
  %832 = vmatpush1.bf16.msra.mxu0 %v466
  %833 = vmatprep.subr.bf16.mxu0 0
  %834 = vmatpush1.bf16.msra.mxu0 %v467
  %835 = vmatprep.subr.bf16.mxu0 0
  %836 = vmatpush1.bf16.msra.mxu0 %v468
  %837 = vmatprep.subr.bf16.mxu0 0
  %838 = vmatpush1.bf16.msra.mxu0 %v469
  %839 = vmatprep.subr.bf16.mxu0 0
  %840 = vmatpush1.bf16.msra.mxu0 %v470
  %841 = vmatprep.subr.bf16.mxu0 0
  %842 = vmatpush1.bf16.msra.mxu0 %v471
  %843 = vmatprep.subr.bf16.mxu0 0
  %844 = vmatpush1.bf16.msra.mxu0 %v472
  %845 = vmatprep.subr.bf16.mxu0 0
  %846 = vmatpush1.bf16.msra.mxu0 %v473
  %847 = vmatprep.subr.bf16.mxu0 0
  %848 = vmatpush1.bf16.msra.mxu0 %v474
  %849 = vmatprep.subr.bf16.mxu0 0
  %850 = vmatpush1.bf16.msra.mxu0 %v475
  %851 = vmatprep.subr.bf16.mxu0 0
  %852 = vmatpush1.bf16.msra.mxu0 %v476
  %853 = vmatprep.subr.bf16.mxu0 0
  %854 = vmatpush1.bf16.msra.mxu0 %v477
  %855 = vmatprep.subr.bf16.mxu0 0
  %856 = vmatpush1.bf16.msra.mxu0 %v478
  %857 = vmatprep.subr.bf16.mxu0 0
  %858 = vmatpush1.bf16.msra.mxu0 %v479
  %859 = vmatprep.subr.bf16.mxu0 0
  %860 = vmatpush1.bf16.msra.mxu0 %v480
  %861 = vmatprep.subr.bf16.mxu0 0
  %862 = vmatpush1.bf16.msra.mxu0 %v481
  %863 = vmatprep.mubr.bf16.mxu0 %v777
  %864 = vmatmul.mubr.bf16.gmra.mrb[0].mxu0 %v776
  %v865 = vpop.f32.mrb[0].mxu0
  %v866 = vadd.f32 %v825, %v865
  %v867 = vpop.f32.mrb[0].mxu0
  %v868 = vpop.f32.mrb[0].mxu0
  %v869 = vadd.f32 %v828, %v868
  %v870 = vpop.f32.mrb[0].mxu0
  %871 = vdwg.mxu0
  %872 = vmatprep.subr.bf16.mxu0 0
  %873 = vmatpush1.bf16.msra.mxu0 %v482
  %874 = vmatprep.subr.bf16.mxu0 0
  %875 = vmatpush1.bf16.msra.mxu0 %v483
  %876 = vmatprep.subr.bf16.mxu0 0
  %877 = vmatpush1.bf16.msra.mxu0 %v484
  %878 = vmatprep.subr.bf16.mxu0 0
  %879 = vmatpush1.bf16.msra.mxu0 %v485
  %880 = vmatprep.subr.bf16.mxu0 0
  %881 = vmatpush1.bf16.msra.mxu0 %v486
  %882 = vmatprep.subr.bf16.mxu0 0
  %883 = vmatpush1.bf16.msra.mxu0 %v487
  %884 = vmatprep.subr.bf16.mxu0 0
  %885 = vmatpush1.bf16.msra.mxu0 %v488
  %886 = vmatprep.subr.bf16.mxu0 0
  %887 = vmatpush1.bf16.msra.mxu0 %v489
  %888 = vmatprep.subr.bf16.mxu0 0
  %889 = vmatpush1.bf16.msra.mxu0 %v490
  %890 = vmatprep.subr.bf16.mxu0 0
  %891 = vmatpush1.bf16.msra.mxu0 %v491
  %892 = vmatprep.subr.bf16.mxu0 0
  %893 = vmatpush1.bf16.msra.mxu0 %v492
  %894 = vmatprep.subr.bf16.mxu0 0
  %895 = vmatpush1.bf16.msra.mxu0 %v493
  %896 = vmatprep.subr.bf16.mxu0 0
  %897 = vmatpush1.bf16.msra.mxu0 %v494
  %898 = vmatprep.subr.bf16.mxu0 0
  %899 = vmatpush1.bf16.msra.mxu0 %v495
  %900 = vmatprep.subr.bf16.mxu0 0
  %901 = vmatpush1.bf16.msra.mxu0 %v496
  %902 = vmatprep.subr.bf16.mxu0 0
  %903 = vmatpush1.bf16.msra.mxu0 %v497
  %904 = vmatprep.mubr.bf16.mxu0 %v779
  %905 = vmatmul.mubr.bf16.gmra.mrb[0].mxu0 %v778
  %v906 = vpop.f32.mrb[0].mxu0
  %v907 = vadd.f32 %v866, %v906
  %v908 = vpop.f32.mrb[0].mxu0
  %v909 = vpop.f32.mrb[0].mxu0
  %v910 = vadd.f32 %v869, %v909
  %v911 = vpop.f32.mrb[0].mxu0
  %912 = vdwg.mxu0
  %913 = vmatprep.subr.bf16.mxu0 0
  %914 = vmatpush1.bf16.msra.mxu0 %v498
  %915 = vmatprep.subr.bf16.mxu0 0
  %916 = vmatpush1.bf16.msra.mxu0 %v499
  %917 = vmatprep.subr.bf16.mxu0 0
  %918 = vmatpush1.bf16.msra.mxu0 %v500
  %919 = vmatprep.subr.bf16.mxu0 0
  %920 = vmatpush1.bf16.msra.mxu0 %v501
  %921 = vmatprep.subr.bf16.mxu0 0
  %922 = vmatpush1.bf16.msra.mxu0 %v502
  %923 = vmatprep.subr.bf16.mxu0 0
  %924 = vmatpush1.bf16.msra.mxu0 %v503
  %925 = vmatprep.subr.bf16.mxu0 0
  %926 = vmatpush1.bf16.msra.mxu0 %v504
  %927 = vmatprep.subr.bf16.mxu0 0
  %928 = vmatpush1.bf16.msra.mxu0 %v505
  %929 = vmatprep.subr.bf16.mxu0 0
  %930 = vmatpush1.bf16.msra.mxu0 %v506
  %931 = vmatprep.subr.bf16.mxu0 0
  %932 = vmatpush1.bf16.msra.mxu0 %v507
  %933 = vmatprep.subr.bf16.mxu0 0
  %934 = vmatpush1.bf16.msra.mxu0 %v508
  %935 = vmatprep.subr.bf16.mxu0 0
  %936 = vmatpush1.bf16.msra.mxu0 %v509
  %937 = vmatprep.subr.bf16.mxu0 0
  %938 = vmatpush1.bf16.msra.mxu0 %v510
  %939 = vmatprep.subr.bf16.mxu0 0
  %940 = vmatpush1.bf16.msra.mxu0 %v511
  %941 = vmatprep.subr.bf16.mxu0 0
  %942 = vmatpush1.bf16.msra.mxu0 %v512
  %943 = vmatprep.subr.bf16.mxu0 0
  %944 = vmatpush1.bf16.msra.mxu0 %v513
  %945 = vmatprep.mubr.bf16.mxu0 %v781
  %946 = vmatmul.mubr.bf16.gmra.mrb[0].mxu0 %v780
  %v947 = vpop.f32.mrb[0].mxu0
  %v948 = vadd.f32 %v907, %v947
  %v949 = vpop.f32.mrb[0].mxu0
  %v950 = vpop.f32.mrb[0].mxu0
  %v951 = vadd.f32 %v910, %v950
  %v952 = vpop.f32.mrb[0].mxu0
  %953 = vdwg.mxu0
  %v954 = vld [vmem:[%s0] sm:$0x1]
  %v955 = vlaneseq
  %v956 = vshrl.u32 %v955, 7
  %v957 = vadd.s32 %v956, 8
  %v958 = vadd.s32 %v956, 16
  %v959 = vadd.s32 %v956, 24
  %v960 = vadd.s32 %v956, 32
  %v961 = vadd.s32 %v956, 40
  %v962 = vadd.s32 %v956, 48
  %v963 = vadd.s32 %v956, 56
  %v964 = vadd.s32 %v956, 64
  %v965 = vadd.s32 %v956, 72
  %v966 = vadd.s32 %v956, 80
  %v967 = vadd.s32 %v956, 88
  %v968 = vadd.s32 %v956, 96
  %v969 = vadd.s32 %v956, 104
  %v970 = vadd.s32 %v956, 112
  %v971 = vadd.s32 %v956, 120
  %v972 = vlaneseq
  %v973 = vshrl.u32 %v972, 7
  %v974 = vsub.s32 0, %v973
  %v975 = vrot.slane %v954, %v974
  %vm976 = vcmp.eq.s32.totalorder %v956, %v975
  %vm977 = vcmp.eq.s32.totalorder %v957, %v975
  %vm978 = vcmp.eq.s32.totalorder %v958, %v975
  %vm979 = vcmp.eq.s32.totalorder %v959, %v975
  %vm980 = vcmp.eq.s32.totalorder %v960, %v975
  %vm981 = vcmp.eq.s32.totalorder %v961, %v975
  %vm982 = vcmp.eq.s32.totalorder %v962, %v975
  %vm983 = vcmp.eq.s32.totalorder %v963, %v975
  %vm984 = vcmp.eq.s32.totalorder %v964, %v975
  %vm985 = vcmp.eq.s32.totalorder %v965, %v975
  %vm986 = vcmp.eq.s32.totalorder %v966, %v975
  %vm987 = vcmp.eq.s32.totalorder %v967, %v975
  %vm988 = vcmp.eq.s32.totalorder %v968, %v975
  %vm989 = vcmp.eq.s32.totalorder %v969, %v975
  %vm990 = vcmp.eq.s32.totalorder %v970, %v975
  %vm991 = vcmp.eq.s32.totalorder %v971, %v975
  %v992 = vsel %vm976, 1, 0
  %v993 = vsel %vm977, 1, 0
  %v994 = vsel %vm978, 1, 0
  %v995 = vsel %vm979, 1, 0
  %v996 = vsel %vm980, 1, 0
  %v997 = vsel %vm981, 1, 0
  %v998 = vsel %vm982, 1, 0
  %v999 = vsel %vm983, 1, 0
  %v1000 = vsel %vm984, 1, 0
  %v1001 = vsel %vm985, 1, 0
  %v1002 = vsel %vm986, 1, 0
  %v1003 = vsel %vm987, 1, 0
  %v1004 = vsel %vm988, 1, 0
  %v1005 = vsel %vm989, 1, 0
  %v1006 = vsel %vm990, 1, 0
  %v1007 = vsel %vm991, 1, 0
  %v1008 = vcvt.s32.f32 %v992
  %v1009 = vcvt.s32.f32 %v993
  %v1010 = vcvt.s32.f32 %v994
  %v1011 = vcvt.s32.f32 %v995
  %v1012 = vcvt.s32.f32 %v996
  %v1013 = vcvt.s32.f32 %v997
  %v1014 = vcvt.s32.f32 %v998
  %v1015 = vcvt.s32.f32 %v999
  %v1016 = vcvt.s32.f32 %v1000
  %v1017 = vcvt.s32.f32 %v1001
  %v1018 = vcvt.s32.f32 %v1002
  %v1019 = vcvt.s32.f32 %v1003
  %v1020 = vcvt.s32.f32 %v1004
  %v1021 = vcvt.s32.f32 %v1005
  %v1022 = vcvt.s32.f32 %v1006
  %v1023 = vcvt.s32.f32 %v1007
  %vm1024 = vcmask 80896
  %v1025 = vsel %vm1024, %v1008, 0.0
  %1026 = vadd.xlane.f32.xlu0 %v1025
  %v1027 = vpop.xlane.xlu0 %1026
  %v1028 = vsel %vm1024, %v1009, 0.0
  %1029 = vadd.xlane.f32.xlu0 %v1028
  %v1030 = vpop.xlane.xlu0 %1029
  %v1031 = vsel %vm1024, %v1010, 0.0
  %1032 = vadd.xlane.f32.xlu0 %v1031
  %v1033 = vpop.xlane.xlu0 %1032
  %v1034 = vsel %vm1024, %v1011, 0.0
  %1035 = vadd.xlane.f32.xlu0 %v1034
  %v1036 = vpop.xlane.xlu0 %1035
  %v1037 = vsel %vm1024, %v1012, 0.0
  %1038 = vadd.xlane.f32.xlu0 %v1037
  %v1039 = vpop.xlane.xlu0 %1038
  %v1040 = vsel %vm1024, %v1013, 0.0
  %1041 = vadd.xlane.f32.xlu0 %v1040
  %v1042 = vpop.xlane.xlu0 %1041
  %v1043 = vsel %vm1024, %v1014, 0.0
  %1044 = vadd.xlane.f32.xlu0 %v1043
  %v1045 = vpop.xlane.xlu0 %1044
  %v1046 = vsel %vm1024, %v1015, 0.0
  %1047 = vadd.xlane.f32.xlu0 %v1046
  %v1048 = vpop.xlane.xlu0 %1047
  %v1049 = vsel %vm1024, %v1016, 0.0
  %1050 = vadd.xlane.f32.xlu0 %v1049
  %v1051 = vpop.xlane.xlu0 %1050
  %v1052 = vsel %vm1024, %v1017, 0.0
  %1053 = vadd.xlane.f32.xlu0 %v1052
  %v1054 = vpop.xlane.xlu0 %1053
  %v1055 = vsel %vm1024, %v1018, 0.0
  %1056 = vadd.xlane.f32.xlu0 %v1055
  %v1057 = vpop.xlane.xlu0 %1056
  %v1058 = vsel %vm1024, %v1019, 0.0
  %1059 = vadd.xlane.f32.xlu0 %v1058
  %v1060 = vpop.xlane.xlu0 %1059
  %v1061 = vsel %vm1024, %v1020, 0.0
  %1062 = vadd.xlane.f32.xlu0 %v1061
  %v1063 = vpop.xlane.xlu0 %1062
  %v1064 = vsel %vm1024, %v1021, 0.0
  %1065 = vadd.xlane.f32.xlu0 %v1064
  %v1066 = vpop.xlane.xlu0 %1065
  %v1067 = vsel %vm1024, %v1022, 0.0
  %1068 = vadd.xlane.f32.xlu0 %v1067
  %v1069 = vpop.xlane.xlu0 %1068
  %v1070 = vsel %vm1024, %v1023, 0.0
  %1071 = vadd.xlane.f32.xlu0 %v1070
  %v1072 = vpop.xlane.xlu0 %1071
  %v1073 = vmax.f32 %v1027, 1.0
  %v1074 = vmax.f32 %v1030, 1.0
  %v1075 = vmax.f32 %v1033, 1.0
  %v1076 = vmax.f32 %v1036, 1.0
  %v1077 = vmax.f32 %v1039, 1.0
  %v1078 = vmax.f32 %v1042, 1.0
  %v1079 = vmax.f32 %v1045, 1.0
  %v1080 = vmax.f32 %v1048, 1.0
  %v1081 = vmax.f32 %v1051, 1.0
  %v1082 = vmax.f32 %v1054, 1.0
  %v1083 = vmax.f32 %v1057, 1.0
  %v1084 = vmax.f32 %v1060, 1.0
  %v1085 = vmax.f32 %v1063, 1.0
  %v1086 = vmax.f32 %v1066, 1.0
  %v1087 = vmax.f32 %v1069, 1.0
  %v1088 = vmax.f32 %v1072, 1.0
  %v1089 = vrcp.pop %v1073
  %v1090 = vmul.f32 %v1008, %v1089
  %v1091 = vrcp.pop %v1074
  %v1092 = vmul.f32 %v1009, %v1091
  %v1093 = vrcp.pop %v1075
  %v1094 = vmul.f32 %v1010, %v1093
  %v1095 = vrcp.pop %v1076
  %v1096 = vmul.f32 %v1011, %v1095
  %v1097 = vrcp.pop %v1077
  %v1098 = vmul.f32 %v1012, %v1097
  %v1099 = vrcp.pop %v1078
  %v1100 = vmul.f32 %v1013, %v1099
  %v1101 = vrcp.pop %v1079
  %v1102 = vmul.f32 %v1014, %v1101
  %v1103 = vrcp.pop %v1080
  %v1104 = vmul.f32 %v1015, %v1103
  %v1105 = vrcp.pop %v1081
  %v1106 = vmul.f32 %v1016, %v1105
  %v1107 = vrcp.pop %v1082
  %v1108 = vmul.f32 %v1017, %v1107
  %v1109 = vrcp.pop %v1083
  %v1110 = vmul.f32 %v1018, %v1109
  %v1111 = vrcp.pop %v1084
  %v1112 = vmul.f32 %v1019, %v1111
  %v1113 = vrcp.pop %v1085
  %v1114 = vmul.f32 %v1020, %v1113
  %v1115 = vrcp.pop %v1086
  %v1116 = vmul.f32 %v1021, %v1115
  %v1117 = vrcp.pop %v1087
  %v1118 = vmul.f32 %v1022, %v1117
  %v1119 = vrcp.pop %v1088
  %v1120 = vmul.f32 %v1023, %v1119
  %v1122 = vsel %vm1024, %v1090, 0
  %v1125 = vsel %vm1024, %v1092, 0
  %v1128 = vsel %vm1024, %v1094, 0
  %v1131 = vsel %vm1024, %v1096, 0
  %v1134 = vsel %vm1024, %v1098, 0
  %v1137 = vsel %vm1024, %v1100, 0
  %v1140 = vsel %vm1024, %v1102, 0
  %v1143 = vsel %vm1024, %v1104, 0
  %v1146 = vsel %vm1024, %v1106, 0
  %v1149 = vsel %vm1024, %v1108, 0
  %v1152 = vsel %vm1024, %v1110, 0
  %v1155 = vsel %vm1024, %v1112, 0
  %v1158 = vsel %vm1024, %v1114, 0
  %v1161 = vsel %vm1024, %v1116, 0
  %v1164 = vsel %vm1024, %v1118, 0
  %v1167 = vsel %vm1024, %v1120, 0
  %vm1169 = vcmask 1041408
  %v1171 = vsel %vm1169, %v739, 0
  %1173 = vmatprep.subr.mxu0 0.0
  %1174 = vmatpush1.msra.mxu0 %v736
  %1175 = vmatprep.subr.mxu0 0.0
  %1176 = vmatpush1.msra.mxu0 %v1171
  %1177 = vmatprep.subr.mxu0 0.0
  %1178 = vmatpush1.msra.mxu0 0.0
  %1179 = vmatprep.subr.mxu0 0.0
  %1180 = vmatpush1.msra.mxu0 0.0
  %1181 = vmatprep.subr.mxu0 0.0
  %1182 = vmatpush1.msra.mxu0 0.0
  %1183 = vmatprep.subr.mxu0 0.0
  %1184 = vmatpush1.msra.mxu0 0.0
  %1185 = vmatprep.subr.mxu0 0.0
  %1186 = vmatpush1.msra.mxu0 0.0
  %1187 = vmatprep.subr.mxu0 0.0
  %1188 = vmatpush1.msra.mxu0 0.0
  %1189 = vmatprep.subr.mxu0 0.0
  %1190 = vmatpush1.msra.mxu0 0.0
  %1191 = vmatprep.subr.mxu0 0.0
  %1192 = vmatpush1.msra.mxu0 0.0
  %1193 = vmatprep.subr.mxu0 0.0
  %1194 = vmatpush1.msra.mxu0 0.0
  %1195 = vmatprep.subr.mxu0 0.0
  %1196 = vmatpush1.msra.mxu0 0.0
  %1197 = vmatprep.subr.mxu0 0.0
  %1198 = vmatpush1.msra.mxu0 0.0
  %1199 = vmatprep.subr.mxu0 0.0
  %1200 = vmatpush1.msra.mxu0 0.0
  %1201 = vmatprep.subr.mxu0 0.0
  %1202 = vmatpush1.msra.mxu0 0.0
  %1203 = vmatprep.subr.mxu0 0.0
  %1204 = vmatpush1.msra.mxu0 0.0
  %1205 = vmatprep.subr.mxu0 0.0
  %1206 = vmatpush1.msra.mxu0 0.0
  %1207 = vmatprep.subr.mxu0 0.0
  %1208 = vmatpush1.msra.mxu0 0.0
  %1209 = vmatprep.subr.mxu0 0.0
  %1210 = vmatpush1.msra.mxu0 0.0
  %1211 = vmatprep.subr.mxu0 0.0
  %1212 = vmatpush1.msra.mxu0 0.0
  %1213 = vmatprep.subr.mxu0 0.0
  %1214 = vmatpush1.msra.mxu0 0.0
  %1215 = vmatprep.subr.mxu0 0.0
  %1216 = vmatpush1.msra.mxu0 0.0
  %1217 = vmatprep.subr.mxu0 0.0
  %1218 = vmatpush1.msra.mxu0 0.0
  %1219 = vmatprep.subr.mxu0 0.0
  %1220 = vmatpush1.msra.mxu0 0.0
  %1221 = vmatprep.subr.mxu0 0.0
  %1222 = vmatpush1.msra.mxu0 0.0
  %1223 = vmatprep.subr.mxu0 0.0
  %1224 = vmatpush1.msra.mxu0 0.0
  %1225 = vmatprep.subr.mxu0 0.0
  %1226 = vmatpush1.msra.mxu0 0.0
  %1227 = vmatprep.subr.mxu0 0.0
  %1228 = vmatpush1.msra.mxu0 0.0
  %1229 = vmatprep.subr.mxu0 0.0
  %1230 = vmatpush1.msra.mxu0 0.0
  %1231 = vmatprep.subr.mxu0 0.0
  %1232 = vmatpush1.msra.mxu0 0.0
  %1233 = vmatprep.subr.mxu0 0.0
  %1234 = vmatpush1.msra.mxu0 0.0
  %1235 = vmatprep.subr.mxu0 0.0
  %1236 = vmatpush1.msra.mxu0 0.0
  %1237 = vmatprep.mubr.f32.mxu0 0.0
  %1238 = vmatmul.mubr.f32.gmra.mrb[0].mxu0 %v1122
  %v1239 = vpop.f32.mrb[0].mxu0
  %v1240 = vadd.f32 0.0, %v1239
  %v1241 = vpop.f32.mrb[0].mxu0
  %1242 = vmatprep.mubr.f32.mxu0 0.0
  %1243 = vmatmul.mubr.f32.gmra.mrb[0].mxu0 %v1125
  %v1244 = vpop.f32.mrb[0].mxu0
  %v1245 = vadd.f32 0.0, %v1244
  %v1246 = vpop.f32.mrb[0].mxu0
  %1247 = vmatprep.mubr.f32.mxu0 0.0
  %1248 = vmatmul.mubr.f32.gmra.mrb[0].mxu0 %v1128
  %v1249 = vpop.f32.mrb[0].mxu0
  %v1250 = vadd.f32 0.0, %v1249
  %v1251 = vpop.f32.mrb[0].mxu0
  %1252 = vmatprep.mubr.f32.mxu0 0.0
  %1253 = vmatmul.mubr.f32.gmra.mrb[0].mxu0 %v1131
  %v1254 = vpop.f32.mrb[0].mxu0
  %v1255 = vadd.f32 0.0, %v1254
  %v1256 = vpop.f32.mrb[0].mxu0
  %1257 = vmatprep.mubr.f32.mxu0 0.0
  %1258 = vmatmul.mubr.f32.gmra.mrb[0].mxu0 %v1134
  %v1259 = vpop.f32.mrb[0].mxu0
  %v1260 = vadd.f32 0.0, %v1259
  %v1261 = vpop.f32.mrb[0].mxu0
  %1262 = vmatprep.mubr.f32.mxu0 0.0
  %1263 = vmatmul.mubr.f32.gmra.mrb[0].mxu0 %v1137
  %v1264 = vpop.f32.mrb[0].mxu0
  %v1265 = vadd.f32 0.0, %v1264
  %v1266 = vpop.f32.mrb[0].mxu0
  %1267 = vmatprep.mubr.f32.mxu0 0.0
  %1268 = vmatmul.mubr.f32.gmra.mrb[0].mxu0 %v1140
  %v1269 = vpop.f32.mrb[0].mxu0
  %v1270 = vadd.f32 0.0, %v1269
  %v1271 = vpop.f32.mrb[0].mxu0
  %1272 = vmatprep.mubr.f32.mxu0 0.0
  %1273 = vmatmul.mubr.f32.gmra.mrb[0].mxu0 %v1143
  %v1274 = vpop.f32.mrb[0].mxu0
  %v1275 = vadd.f32 0.0, %v1274
  %v1276 = vpop.f32.mrb[0].mxu0
  %1277 = vmatprep.mubr.f32.mxu0 0.0
  %1278 = vmatmul.mubr.f32.gmra.mrb[0].mxu0 %v1146
  %v1279 = vpop.f32.mrb[0].mxu0
  %v1280 = vadd.f32 0.0, %v1279
  %v1281 = vpop.f32.mrb[0].mxu0
  %1282 = vmatprep.mubr.f32.mxu0 0.0
  %1283 = vmatmul.mubr.f32.gmra.mrb[0].mxu0 %v1149
  %v1284 = vpop.f32.mrb[0].mxu0
  %v1285 = vadd.f32 0.0, %v1284
  %v1286 = vpop.f32.mrb[0].mxu0
  %1287 = vmatprep.mubr.f32.mxu0 0.0
  %1288 = vmatmul.mubr.f32.gmra.mrb[0].mxu0 %v1152
  %v1289 = vpop.f32.mrb[0].mxu0
  %v1290 = vadd.f32 0.0, %v1289
  %v1291 = vpop.f32.mrb[0].mxu0
  %1292 = vmatprep.mubr.f32.mxu0 0.0
  %1293 = vmatmul.mubr.f32.gmra.mrb[0].mxu0 %v1155
  %v1294 = vpop.f32.mrb[0].mxu0
  %v1295 = vadd.f32 0.0, %v1294
  %v1296 = vpop.f32.mrb[0].mxu0
  %1297 = vmatprep.mubr.f32.mxu0 0.0
  %1298 = vmatmul.mubr.f32.gmra.mrb[0].mxu0 %v1158
  %v1299 = vpop.f32.mrb[0].mxu0
  %v1300 = vadd.f32 0.0, %v1299
  %v1301 = vpop.f32.mrb[0].mxu0
  %1302 = vmatprep.mubr.f32.mxu0 0.0
  %1303 = vmatmul.mubr.f32.gmra.mrb[0].mxu0 %v1161
  %v1304 = vpop.f32.mrb[0].mxu0
  %v1305 = vadd.f32 0.0, %v1304
  %v1306 = vpop.f32.mrb[0].mxu0
  %1307 = vmatprep.mubr.f32.mxu0 0.0
  %1308 = vmatmul.mubr.f32.gmra.mrb[0].mxu0 %v1164
  %v1309 = vpop.f32.mrb[0].mxu0
  %v1310 = vadd.f32 0.0, %v1309
  %v1311 = vpop.f32.mrb[0].mxu0
  %1312 = vmatprep.mubr.f32.mxu0 0.0
  %1313 = vmatmul.mubr.f32.gmra.mrb[0].mxu0 %v1167
  %v1314 = vpop.f32.mrb[0].mxu0
  %v1315 = vadd.f32 0.0, %v1314
  %v1316 = vpop.f32.mrb[0].mxu0
  %1317 = vdwg.mxu0
  %vm1318 = vcmask 523264
  %v1320 = vsel %vm1318, %v948, 0
  %v1323 = vsel %vm1318, %v951, 0
  %v1326 = vsel %vm1318, %v1240, 0
  %v1329 = vsel %vm1318, %v1245, 0
  %v1332 = vsel %vm1318, %v1250, 0
  %v1335 = vsel %vm1318, %v1255, 0
  %v1338 = vsel %vm1318, %v1260, 0
  %v1341 = vsel %vm1318, %v1265, 0
  %v1344 = vsel %vm1318, %v1270, 0
  %v1347 = vsel %vm1318, %v1275, 0
  %v1350 = vsel %vm1318, %v1280, 0
  %v1353 = vsel %vm1318, %v1285, 0
  %v1356 = vsel %vm1318, %v1290, 0
  %v1359 = vsel %vm1318, %v1295, 0
  %v1362 = vsel %vm1318, %v1300, 0
  %v1365 = vsel %vm1318, %v1305, 0
  %v1368 = vsel %vm1318, %v1310, 0
  %v1371 = vsel %vm1318, %v1315, 0
  %1373 = vmatprep.subr.mxu0 0.0
  %1374 = vmatpush1.xpose.msra.mxu0 %v1326
  %1375 = vmatprep.subr.mxu0 0.0
  %1376 = vmatpush1.xpose.msra.mxu0 %v1329
  %1377 = vmatprep.subr.mxu0 0.0
  %1378 = vmatpush1.xpose.msra.mxu0 %v1332
  %1379 = vmatprep.subr.mxu0 0.0
  %1380 = vmatpush1.xpose.msra.mxu0 %v1335
  %1381 = vmatprep.subr.mxu0 0.0
  %1382 = vmatpush1.xpose.msra.mxu0 %v1338
  %1383 = vmatprep.subr.mxu0 0.0
  %1384 = vmatpush1.xpose.msra.mxu0 %v1341
  %1385 = vmatprep.subr.mxu0 0.0
  %1386 = vmatpush1.xpose.msra.mxu0 %v1344
  %1387 = vmatprep.subr.mxu0 0.0
  %1388 = vmatpush1.xpose.msra.mxu0 %v1347
  %1389 = vmatprep.subr.mxu0 0.0
  %1390 = vmatpush1.xpose.msra.mxu0 %v1350
  %1391 = vmatprep.subr.mxu0 0.0
  %1392 = vmatpush1.xpose.msra.mxu0 %v1353
  %1393 = vmatprep.subr.mxu0 0.0
  %1394 = vmatpush1.xpose.msra.mxu0 %v1356
  %1395 = vmatprep.subr.mxu0 0.0
  %1396 = vmatpush1.xpose.msra.mxu0 %v1359
  %1397 = vmatprep.subr.mxu0 0.0
  %1398 = vmatpush1.xpose.msra.mxu0 %v1362
  %1399 = vmatprep.subr.mxu0 0.0
  %1400 = vmatpush1.xpose.msra.mxu0 %v1365
  %1401 = vmatprep.subr.mxu0 0.0
  %1402 = vmatpush1.xpose.msra.mxu0 %v1368
  %1403 = vmatprep.subr.mxu0 0.0
  %1404 = vmatpush1.xpose.msra.mxu0 %v1371
  %1405 = vmatprep.subr.mxu0 0.0
  %1406 = vmatpush1.xpose.msra.mxu0 0.0
  %1407 = vmatprep.subr.mxu0 0.0
  %1408 = vmatpush1.xpose.msra.mxu0 0.0
  %1409 = vmatprep.subr.mxu0 0.0
  %1410 = vmatpush1.xpose.msra.mxu0 0.0
  %1411 = vmatprep.subr.mxu0 0.0
  %1412 = vmatpush1.xpose.msra.mxu0 0.0
  %1413 = vmatprep.subr.mxu0 0.0
  %1414 = vmatpush1.xpose.msra.mxu0 0.0
  %1415 = vmatprep.subr.mxu0 0.0
  %1416 = vmatpush1.xpose.msra.mxu0 0.0
  %1417 = vmatprep.subr.mxu0 0.0
  %1418 = vmatpush1.xpose.msra.mxu0 0.0
  %1419 = vmatprep.subr.mxu0 0.0
  %1420 = vmatpush1.xpose.msra.mxu0 0.0
  %1421 = vmatprep.subr.mxu0 0.0
  %1422 = vmatpush1.xpose.msra.mxu0 0.0
  %1423 = vmatprep.subr.mxu0 0.0
  %1424 = vmatpush1.xpose.msra.mxu0 0.0
  %1425 = vmatprep.subr.mxu0 0.0
  %1426 = vmatpush1.xpose.msra.mxu0 0.0
  %1427 = vmatprep.subr.mxu0 0.0
  %1428 = vmatpush1.xpose.msra.mxu0 0.0
  %1429 = vmatprep.subr.mxu0 0.0
  %1430 = vmatpush1.xpose.msra.mxu0 0.0
  %1431 = vmatprep.subr.mxu0 0.0
  %1432 = vmatpush1.xpose.msra.mxu0 0.0
  %1433 = vmatprep.subr.mxu0 0.0
  %1434 = vmatpush1.xpose.msra.mxu0 0.0
  %1435 = vmatprep.subr.mxu0 0.0
  %1436 = vmatpush1.xpose.msra.mxu0 0.0
  %1437 = vmatprep.mubr.f32.mxu0 0.0
  %1438 = vmatmul.mubr.f32.gmra.mrb[0].mxu0 %v1320
  %v1439 = vpop.f32.mrb[0].mxu0
  %v1440 = vadd.f32 0.0, %v1439
  %v1441 = vpop.f32.mrb[0].mxu0
  %1442 = vmatprep.mubr.f32.mxu0 0.0
  %1443 = vmatmul.mubr.f32.gmra.mrb[0].mxu0 %v1323
  %v1444 = vpop.f32.mrb[0].mxu0
  %v1445 = vadd.f32 0.0, %v1444
  %v1446 = vpop.f32.mrb[0].mxu0
  %1447 = vdwg.mxu0
  %v1448 = vmul.f32 %v1240, %v1240
  %v1449 = vmul.f32 %v1245, %v1245
  %v1450 = vmul.f32 %v1250, %v1250
  %v1451 = vmul.f32 %v1255, %v1255
  %v1452 = vmul.f32 %v1260, %v1260
  %v1453 = vmul.f32 %v1265, %v1265
  %v1454 = vmul.f32 %v1270, %v1270
  %v1455 = vmul.f32 %v1275, %v1275
  %v1456 = vmul.f32 %v1280, %v1280
  %v1457 = vmul.f32 %v1285, %v1285
  %v1458 = vmul.f32 %v1290, %v1290
  %v1459 = vmul.f32 %v1295, %v1295
  %v1460 = vmul.f32 %v1300, %v1300
  %v1461 = vmul.f32 %v1305, %v1305
  %v1462 = vmul.f32 %v1310, %v1310
  %v1463 = vmul.f32 %v1315, %v1315
  %v1465 = vsel %vm1318, 1.0, 0
  %v1468 = vsel %vm1318, %v1448, 0
  %v1471 = vsel %vm1318, %v1449, 0
  %v1474 = vsel %vm1318, %v1450, 0
  %v1477 = vsel %vm1318, %v1451, 0
  %v1480 = vsel %vm1318, %v1452, 0
  %v1483 = vsel %vm1318, %v1453, 0
  %v1486 = vsel %vm1318, %v1454, 0
  %v1489 = vsel %vm1318, %v1455, 0
  %v1492 = vsel %vm1318, %v1456, 0
  %v1495 = vsel %vm1318, %v1457, 0
  %v1498 = vsel %vm1318, %v1458, 0
  %v1501 = vsel %vm1318, %v1459, 0
  %v1504 = vsel %vm1318, %v1460, 0
  %v1507 = vsel %vm1318, %v1461, 0
  %v1510 = vsel %vm1318, %v1462, 0
  %v1513 = vsel %vm1318, %v1463, 0
  %1515 = vmatprep.subr.mxu0 0.0
  %1516 = vmatpush1.xpose.msra.mxu0 %v1468
  %1517 = vmatprep.subr.mxu0 0.0
  %1518 = vmatpush1.xpose.msra.mxu0 %v1471
  %1519 = vmatprep.subr.mxu0 0.0
  %1520 = vmatpush1.xpose.msra.mxu0 %v1474
  %1521 = vmatprep.subr.mxu0 0.0
  %1522 = vmatpush1.xpose.msra.mxu0 %v1477
  %1523 = vmatprep.subr.mxu0 0.0
  %1524 = vmatpush1.xpose.msra.mxu0 %v1480
  %1525 = vmatprep.subr.mxu0 0.0
  %1526 = vmatpush1.xpose.msra.mxu0 %v1483
  %1527 = vmatprep.subr.mxu0 0.0
  %1528 = vmatpush1.xpose.msra.mxu0 %v1486
  %1529 = vmatprep.subr.mxu0 0.0
  %1530 = vmatpush1.xpose.msra.mxu0 %v1489
  %1531 = vmatprep.subr.mxu0 0.0
  %1532 = vmatpush1.xpose.msra.mxu0 %v1492
  %1533 = vmatprep.subr.mxu0 0.0
  %1534 = vmatpush1.xpose.msra.mxu0 %v1495
  %1535 = vmatprep.subr.mxu0 0.0
  %1536 = vmatpush1.xpose.msra.mxu0 %v1498
  %1537 = vmatprep.subr.mxu0 0.0
  %1538 = vmatpush1.xpose.msra.mxu0 %v1501
  %1539 = vmatprep.subr.mxu0 0.0
  %1540 = vmatpush1.xpose.msra.mxu0 %v1504
  %1541 = vmatprep.subr.mxu0 0.0
  %1542 = vmatpush1.xpose.msra.mxu0 %v1507
  %1543 = vmatprep.subr.mxu0 0.0
  %1544 = vmatpush1.xpose.msra.mxu0 %v1510
  %1545 = vmatprep.subr.mxu0 0.0
  %1546 = vmatpush1.xpose.msra.mxu0 %v1513
  %1547 = vmatprep.subr.mxu0 0.0
  %1548 = vmatpush1.xpose.msra.mxu0 0.0
  %1549 = vmatprep.subr.mxu0 0.0
  %1550 = vmatpush1.xpose.msra.mxu0 0.0
  %1551 = vmatprep.subr.mxu0 0.0
  %1552 = vmatpush1.xpose.msra.mxu0 0.0
  %1553 = vmatprep.subr.mxu0 0.0
  %1554 = vmatpush1.xpose.msra.mxu0 0.0
  %1555 = vmatprep.subr.mxu0 0.0
  %1556 = vmatpush1.xpose.msra.mxu0 0.0
  %1557 = vmatprep.subr.mxu0 0.0
  %1558 = vmatpush1.xpose.msra.mxu0 0.0
  %1559 = vmatprep.subr.mxu0 0.0
  %1560 = vmatpush1.xpose.msra.mxu0 0.0
  %1561 = vmatprep.subr.mxu0 0.0
  %1562 = vmatpush1.xpose.msra.mxu0 0.0
  %1563 = vmatprep.subr.mxu0 0.0
  %1564 = vmatpush1.xpose.msra.mxu0 0.0
  %1565 = vmatprep.subr.mxu0 0.0
  %1566 = vmatpush1.xpose.msra.mxu0 0.0
  %1567 = vmatprep.subr.mxu0 0.0
  %1568 = vmatpush1.xpose.msra.mxu0 0.0
  %1569 = vmatprep.subr.mxu0 0.0
  %1570 = vmatpush1.xpose.msra.mxu0 0.0
  %1571 = vmatprep.subr.mxu0 0.0
  %1572 = vmatpush1.xpose.msra.mxu0 0.0
  %1573 = vmatprep.subr.mxu0 0.0
  %1574 = vmatpush1.xpose.msra.mxu0 0.0
  %1575 = vmatprep.subr.mxu0 0.0
  %1576 = vmatpush1.xpose.msra.mxu0 0.0
  %1577 = vmatprep.subr.mxu0 0.0
  %1578 = vmatpush1.xpose.msra.mxu0 0.0
  %1579 = vmatprep.mubr.f32.mxu0 0.0
  %1580 = vmatmul.mubr.f32.gmra.mrb[0].mxu0 %v1465
  %v1581 = vpop.f32.mrb[0].mxu0
  %v1582 = vadd.f32 0.0, %v1581
  %v1583 = vpop.f32.mrb[0].mxu0
  %1584 = vdwg.mxu0
  %v1585 = vmul.f32 %v948, %v948
  %v1586 = vmul.f32 %v951, %v951
  %v1587 = vsel %vm1318, %v1585, 0.0
  %1588 = vadd.xlane.f32.xlu0 %v1587
  %v1589 = vpop.xlane.xlu0 %1588
  %vm1590 = vcmask 522240
  %v1591 = vsel %vm1590, %v1586, 0.0
  %1592 = vadd.xlane.f32.xlu0 %v1591
  %v1593 = vpop.xlane.xlu0 %1592
  %v1594 = vlaneseq
  %v1595 = vshrl.u32 %v1594, 7
  %v1596 = vsub.s32 0, %v1595
  %v1597 = vrot.slane %v1582, %v1596
  %v1598 = vadd.f32 %v1589, %v1597
  %v1599 = vadd.f32 %v1593, %v1597
  %v1600 = vmul.f32 %v1440, 2.0
  %v1601 = vmul.f32 %v1445, 2.0
  %v1602 = vsub.f32 %v1598, %v1600
  %v1603 = vsub.f32 %v1599, %v1601
  %v1604 = vmax.f32 %v1602, 0.0
  %v1605 = vmax.f32 %v1603, 0.0
  %v1606 = vrsqrt.pop %v1604
  %v1607 = vmul.f32 %v1604, %v1606
  %vm1608 = vcmp.eq.f32.partialorder %v1604, inf
  %v1609 = vsel %vm1608, %v1604, %v1607
  %vm1610 = vcmp.eq.f32.partialorder %v1604, 0.0
  %v1611 = vand.u32 %v1604, 2147483648
  %v1612 = vsel %vm1610, %v1611, %v1609
  %v1613 = vrsqrt.pop %v1605
  %v1614 = vmul.f32 %v1605, %v1613
  %vm1615 = vcmp.eq.f32.partialorder %v1605, inf
  %v1616 = vsel %vm1615, %v1605, %v1614
  %vm1617 = vcmp.eq.f32.partialorder %v1605, 0.0
  %v1618 = vand.u32 %v1605, 2147483648
  %v1619 = vsel %vm1617, %v1618, %v1616
  %v1620 = vsub.f32 0.0, %v1612
  %v1621 = vsub.f32 0.0, %v1619
  %1622 = vst [vmem:[%s4] sm:$0xff] %v1620
  %1623 = vst [vmem:[%s4 + $0x8] sm:$0x7f] %v1621
  // Predicated region
  $region18: #{prototypical_forward.1} parent=0 // pred_check
    _
  $region19: #{prototypical_forward.1} parent=0 // pred_check_branch
    %1625 = sbr.rel (0) target = $region21
  $region20: #{prototypical_forward.1} parent=0 // pred_region
    _
  $region21: #{prototypical_forward.1} parent=0 // pred_fallthru
    _
  // Predicated region
  $region22: #{prototypical_forward.1} parent=0 // pred_check
    _
  $region23: #{prototypical_forward.1} parent=0 // pred_check_branch
    %1627 = sbr.rel (0) target = $region25
  $region24: #{prototypical_forward.1} parent=0 // pred_region
    _
  $region25: #{prototypical_forward.1} parent=0 // pred_fallthru
    _

</llo_original>
